<compile_context>
chip_gen: v5e
topology: v5e:2x2
jax: 0.10.0
libtpu: 0.0.40
codegen_flags: <defaults>
</compile_context>

<pallas_src>
import functools

import jax
import jax.numpy as jnp
from jax import lax
from jax.experimental import pallas as pl
from jax.experimental.pallas import tpu as pltpu


_NB_PAD = 128  # bin slots padded to a full vreg lane width (bins live on lanes)


def _ece_kernel(logits_ref, labels_ref, out_ref, *,
                n_bins: int, n_total: int, tile_n: int, tiles_per_core: int):
    c = pl.program_id(0)   # TensorCore split ("parallel")
    i = pl.program_id(1)   # tiles over N handled by this core ("arbitrary")

    # Per-core per-bin accumulator = the resident (8, 128) output block.
    @pl.when(i == 0)
    def _():
        out_ref[...] = jnp.zeros_like(out_ref)

    logits = logits_ref[...].astype(jnp.float32)     # (TILE_N, C)
    labels = labels_ref[...]                         # (TILE_N, 1) int32
    tn, ncls = logits.shape

    # confidence = max(softmax) = 1 / sum(exp(x - rowmax)); pred = argmax(x).
    # Exact divide on purpose (bin-edge safety) — no approx reciprocal.
    m = jnp.max(logits, axis=1, keepdims=True)
    s = jnp.sum(jnp.exp(logits - m), axis=1, keepdims=True)
    conf = 1.0 / s                                    # (TILE_N, 1)

    col = lax.broadcasted_iota(jnp.int32, (tn, ncls), 1)
    is_max = logits >= m
    pred = jnp.min(jnp.where(is_max, col, jnp.int32(ncls)), axis=1, keepdims=True)
    acc = (pred == labels).astype(jnp.float32)        # (TILE_N, 1)

    # Mask rows past the true N: the partial last tile AND the duplicated
    # (clamped) overhang tile of the 2-core split.  gidx uses the LOGICAL
    # (unclamped) tile index, so every overhang row is >= n_total and zeroed.
    row = lax.broadcasted_iota(jnp.int32, (tn, 1), 0)
    gidx = (c * tiles_per_core + i) * tile_n + row
    valid = gidx < n_total
    conf = jnp.where(valid, conf, 0.0)                # conf == 0 falls in no bin
    diff = jnp.where(valid, conf - acc, 0.0)

    # One lane-dense bin mask: bins on the lane axis, padded to 128 lanes.
    # For j >= n_bins, lo_j >= 1 >= conf so those lanes never match.
    # Two-compare form kept for exact (lo, hi] edge semantics; the select is
    # folded into a single multiply.
    b = lax.broadcasted_iota(jnp.int32, (1, _NB_PAD), 1).astype(jnp.float32)
    nbf = jnp.float32(n_bins)
    lo = b / nbf
    hi = (b + 1.0) / nbf
    in_bin = jnp.logical_and(conf > lo, conf <= hi).astype(jnp.float32)
    masked = in_bin * diff                            # (TILE_N, NB_PAD)

    # Keep 8-sublane partials: collapse whole vregs only (plain vreg adds, no
    # cross-sublane reduce, full unmasked accumulate into the output block).
    # The wrapper finishes the 8 -> 1 collapse together with the core merge.
    if tile_n % 8 == 0:
        out_ref[...] += jnp.sum(masked.reshape(tile_n // 8, 8, _NB_PAD), axis=0)
    else:
        out_ref[0:1, :] += jnp.sum(masked, axis=0, keepdims=True)


def _vmem_limit_bytes() -> int:
    """Per-generation scoped-VMEM limit, with headroom for compiler scratch."""
    cap = 64 * 2**20  # conservative fallback (v7x per-TC physical VMEM)
    try:
        cap = int(getattr(pltpu.get_tpu_info(), "vmem_capacity_bytes", cap))
    except Exception:
        pass
    # v7x: 64 MiB physical -> ~48 MiB usable; v5e/v6e: 128 MiB -> 100 MiB cap.
    return int(max(32 * 2**20, min(cap - 16 * 2**20, 100 * 2**20)))


def _pick_tile_n(c: int, itemsize: int, vmem_limit: int) -> int:
    """Biggest tile_n (multiple of 8) whose buffers fit the VMEM budget."""
    # Per-row VMEM footprint (bytes):
    #   double-buffered logits tile              : 2 * c * itemsize
    #   f32 cast + exp temporaries               : 2 * c * 4
    #   double-buffered labels, LANE-PADDED      : 2 * 128 * 4   (not 2 * 4!)
    #   (tile_n, 128) bin mask + masked diff     : 2 * 128 * 4
    row_bytes = 2 * c * itemsize + 2 * c * 4 + 4 * 128 * 4
    usable = max(2**20, vmem_limit - 8 * 2**20)   # headroom for out/acc/misc
    tile_n = usable // row_bytes
    # Target 2-8 MiB of logits per tile (HBM-streaming sweet spot); no row cap
    # beyond the VMEM budget itself.
    tile_n = min(tile_n, max(8, (8 * 2**20) // max(1, c * itemsize)))
    tile_n = max(8, tile_n - tile_n % 8)
    return int(tile_n)


def ece_loss(logits, labels, n_bins: int = 20, tile_n=None):
    """Pallas ECE. logits: (N, C), labels: (N,) int. Returns shape (1,) f32."""
    n, c = logits.shape
    labels2d = labels.reshape(n, 1).astype(jnp.int32)
    itemsize = jnp.dtype(logits.dtype).itemsize

    vmem_limit = _vmem_limit_bytes()
    if tile_n is None:
        tile_n = _pick_tile_n(c, itemsize, vmem_limit)
    if n <= tile_n:
        tile_n = n                        # one tile spanning the full N axis
    num_tiles = int(pl.cdiv(n, tile_n))

    # Always use both v7x TensorCores when there is more than one tile.  On
    # single-TC chips the leading "parallel" axis just runs sequentially; an
    # odd tile count only costs one duplicated (fully masked) tile.
    num_cores = 2 if num_tiles >= 2 else 1
    tiles_per_core = int(pl.cdiv(num_tiles, num_cores))
    last_tile = num_tiles - 1

    def logits_map(cc, ii):
        return (jnp.minimum(cc * tiles_per_core + ii, last_tile), 0)

    def labels_map(cc, ii):
        return (jnp.minimum(cc * tiles_per_core + ii, last_tile), 0)

    cost = pl.CostEstimate(
        flops=int(6 * n * c),
        transcendentals=int(n * c),
        bytes_accessed=int(n * c * itemsize + n * 4 + num_cores * 8 * _NB_PAD * 4),
    )

    kernel = functools.partial(
        _ece_kernel, n_bins=n_bins, n_total=n,
        tile_n=tile_n, tiles_per_core=tiles_per_core)

    partials = pl.pallas_call(
        kernel,
        out_shape=jax.ShapeDtypeStruct((num_cores * 8, _NB_PAD), jnp.float32),
        grid_spec=pltpu.PrefetchScalarGridSpec(
            num_scalar_prefetch=0,
            grid=(num_cores, tiles_per_core),
            in_specs=[
                pl.BlockSpec((tile_n, c), logits_map),
                pl.BlockSpec((tile_n, 1), labels_map),
            ],
            out_specs=pl.BlockSpec((8, _NB_PAD), lambda cc, ii: (cc, 0)),
        ),
        compiler_params=pltpu.CompilerParams(
            dimension_semantics=("parallel", "arbitrary"),
            vmem_limit_bytes=int(vmem_limit),
        ),
        cost_estimate=cost,
    )(logits, labels2d)          # logits in native dtype (bf16 -> half the HBM)

    # Merge per-core / per-sublane partial bin sums, then
    #   ece = sum_bins |sum_in_bin(conf - acc)| / N  ==  sum_bins gap * prop.
    per_bin = jnp.sum(partials[:, :n_bins], axis=0)
    ece = jnp.sum(jnp.abs(per_bin)) / jnp.float32(n)
    return ece.reshape(1)


def _ece_reference(logits, labels, n_bins: int = 20):
    """Plain-JAX reference mirroring the PyTorch forward (for verification)."""
    soft = jax.nn.softmax(logits.astype(jnp.float32), axis=1)
    conf = jnp.max(soft, axis=1)
    pred = jnp.argmax(soft, axis=1)
    acc = (pred == labels).astype(jnp.float32)
    n = conf.shape[0]
    ece = 0.0
    for i in range(n_bins):
        lo, hi = i / n_bins, (i + 1) / n_bins
        in_bin = jnp.logical_and(conf > lo, conf <= hi)
        cnt = jnp.sum(in_bin.astype(jnp.float32))
        safe = jnp.maximum(cnt, 1.0)
        acc_in = jnp.sum(acc * in_bin) / safe
        conf_in = jnp.sum(conf * in_bin) / safe
        prop = cnt / n
        ece = ece + jnp.where(cnt > 0, jnp.abs(conf_in - acc_in) * prop, 0.0)
    return jnp.asarray([ece], dtype=jnp.float32)


if __name__ == "__main__":
    key = jax.random.PRNGKey(0)
    k_logits, k_labels = jax.random.split(key)

    # Small shapes exercising all paths: 2-core split, resident accumulator,
    # partial-last-tile masking, and the clamped odd-tile-count overhang.
    N, C = 56, 32
    logits = jax.random.normal(k_logits, (N, C), dtype=jnp.float32) * 3.0
    labels = jax.random.randint(k_labels, (N,), 0, C, dtype=jnp.int32)

    ref = _ece_reference(logits, labels, n_bins=20)

    # (a) even tile count -> clean 2-core split + partial last tile.
    ece_a = jax.block_until_ready(ece_loss(logits, labels, n_bins=20, tile_n=16))
    # (b) odd tile count -> cdiv split with clamped, fully-masked overhang tile.
    ece_b = jax.block_until_ready(ece_loss(logits, labels, n_bins=20, tile_n=24))
    # (c) autotuned tile -> single tile spanning all of N.
    ece_c = jax.block_until_ready(ece_loss(logits, labels, n_bins=20))

    for ece in (ece_a, ece_b, ece_c):
        assert ece.shape == (1,)
        assert jnp.allclose(ece, ref, atol=1e-5), (ece, ref)

    print("KERNEL_OK")
</pallas_src>

<mosaic_0001>
module attributes {stable_mosaic.version = 11 : i64} {
  func.func @_ece_kernel(%arg0: i32, %arg1: i32, %arg2: memref<16x32xf32, #tpu.memory_space<vmem>>, %arg3: memref<16x1xi32, #tpu.memory_space<vmem>>, %arg4: memref<8x128xf32, #tpu.memory_space<vmem>>) attributes {dimension_semantics = [#tpu.dimension_semantics<parallel>, #tpu.dimension_semantics<arbitrary>], iteration_bounds = array<i64: 2, 2>, scalar_prefetch = 0 : i64, scratch_operands = 0 : i64, tpu.core_type = #tpu.core_type<tc>, window_params = [{transform_indices = @transform_0, window_bounds = array<i64: 16, 32>}, {transform_indices = @transform_1, window_bounds = array<i64: 16, 1>}, {transform_indices = @transform_2, window_bounds = array<i64: 8, 128>}]} {
    %c0_i32 = arith.constant 0 : i32
    %0 = arith.cmpi eq, %arg1, %c0_i32 : i32
    %1 = arith.extui %0 : i1 to i32
    %c0_i32_0 = arith.constant 0 : i32
    %2 = arith.cmpi ne, %1, %c0_i32_0 : i32
    scf.if %2 {
      %cst_17 = arith.constant 0.000000e+00 : f32
      %61 = vector.broadcast %cst_17 : f32 to vector<8x128xf32>
      %c0_18 = arith.constant 0 : index
      %c0_19 = arith.constant 0 : index
      %62 = vector.load %arg4[%c0_18, %c0_19] : memref<8x128xf32, #tpu.memory_space<vmem>>, vector<8x128xf32>
      tpu.vector_store %arg4[%c0_18, %c0_19], %61 {strides = array<i32>} : memref<8x128xf32, #tpu.memory_space<vmem>>, vector<8x128xf32>,
    } else {
    }
    %c0 = arith.constant 0 : index
    %c0_1 = arith.constant 0 : index
    %3 = vector.load %arg2[%c0, %c0_1] : memref<16x32xf32, #tpu.memory_space<vmem>>, vector<16x32xf32>
    %c0_2 = arith.constant 0 : index
    %c0_3 = arith.constant 0 : index
    %4 = vector.load %arg3[%c0_2, %c0_3] : memref<16x1xi32, #tpu.memory_space<vmem>>, vector<16x1xi32>
    %cst = arith.constant dense<0xFF800000> : vector<16xf32>
    %5 = vector.multi_reduction <maximumf>, %3, %cst [1] : vector<16x32xf32> to vector<16xf32>
    %6 = vector.shape_cast %5 : vector<16xf32> to vector<16x1xf32>
    %7 = vector.broadcast %6 : vector<16x1xf32> to vector<16x32xf32>
    %8 = arith.subf %3, %7 : vector<16x32xf32>
    %9 = math.exp %8 : vector<16x32xf32>
    %cst_4 = arith.constant dense<0.000000e+00> : vector<16xf32>
    %10 = vector.multi_reduction <add>, %9, %cst_4 [1] : vector<16x32xf32> to vector<16xf32>
    %11 = vector.shape_cast %10 : vector<16xf32> to vector<16x1xf32>
    %cst_5 = arith.constant 1.000000e+00 : f32
    %12 = vector.broadcast %cst_5 : f32 to vector<16x1xf32>
    %13 = arith.divf %12, %11 : vector<16x1xf32>
    %14 = tpu.iota {dimensions = array<i32: 1>} : vector<16x32xi32>
    %15 = vector.broadcast %6 : vector<16x1xf32> to vector<16x32xf32>
    %16 = arith.cmpf oge, %3, %15 : vector<16x32xf32>
    %c32_i32 = arith.constant 32 : i32
    %17 = vector.broadcast %c32_i32 : i32 to vector<16x32xi32>
    %18 = arith.select %16, %14, %17 : vector<16x32xi1>, vector<16x32xi32>
    %cst_6 = arith.constant dense<2147483647> : vector<16xi32>
    %19 = vector.multi_reduction <minsi>, %18, %cst_6 [1] : vector<16x32xi32> to vector<16xi32>
    %20 = vector.shape_cast %19 : vector<16xi32> to vector<16x1xi32>
    %21 = arith.cmpi eq, %20, %4 : vector<16x1xi32>
    %22 = arith.extui %21 : vector<16x1xi1> to vector<16x1xi32>
    %23 = arith.sitofp %22 : vector<16x1xi32> to vector<16x1xf32>
    %24 = tpu.iota {dimensions = array<i32: 0>} : vector<16x1xi32>
    %c2_i32 = arith.constant 2 : i32
    %25 = arith.muli %arg0, %c2_i32 : i32
    %26 = arith.addi %25, %arg1 : i32
    %c16_i32 = arith.constant 16 : i32
    %27 = arith.muli %26, %c16_i32 : i32
    %28 = vector.broadcast %27 : i32 to vector<16x1xi32>
    %29 = arith.addi %28, %24 : vector<16x1xi32>
    %c56_i32 = arith.constant 56 : i32
    %30 = vector.broadcast %c56_i32 : i32 to vector<16x1xi32>
    %31 = arith.cmpi slt, %29, %30 : vector<16x1xi32>
    %cst_7 = arith.constant 0.000000e+00 : f32
    %32 = vector.broadcast %cst_7 : f32 to vector<16x1xf32>
    %33 = arith.select %31, %13, %32 : vector<16x1xi1>, vector<16x1xf32>
    %34 = arith.subf %33, %23 : vector<16x1xf32>
    %cst_8 = arith.constant 0.000000e+00 : f32
    %35 = vector.broadcast %cst_8 : f32 to vector<16x1xf32>
    %36 = arith.select %31, %34, %35 : vector<16x1xi1>, vector<16x1xf32>
    %37 = tpu.iota {dimensions = array<i32: 1>} : vector<1x128xi32>
    %38 = arith.sitofp %37 : vector<1x128xi32> to vector<1x128xf32>
    %cst_9 = arith.constant 2.000000e+01 : f32
    %39 = vector.broadcast %cst_9 : f32 to vector<1x128xf32>
    %40 = arith.divf %38, %39 : vector<1x128xf32>
    %cst_10 = arith.constant 1.000000e+00 : f32
    %41 = vector.broadcast %cst_10 : f32 to vector<1x128xf32>
    %42 = arith.addf %38, %41 : vector<1x128xf32>
    %cst_11 = arith.constant 2.000000e+01 : f32
    %43 = vector.broadcast %cst_11 : f32 to vector<1x128xf32>
    %44 = arith.divf %42, %43 : vector<1x128xf32>
    %45 = vector.broadcast %33 : vector<16x1xf32> to vector<16x128xf32>
    %46 = vector.broadcast %40 : vector<1x128xf32> to vector<16x128xf32>
    %47 = arith.cmpf ogt, %45, %46 : vector<16x128xf32>
    %48 = vector.broadcast %33 : vector<16x1xf32> to vector<16x128xf32>
    %49 = vector.broadcast %44 : vector<1x128xf32> to vector<16x128xf32>
    %50 = arith.cmpf ole, %48, %49 : vector<16x128xf32>
    %51 = arith.andi %47, %50 : vector<16x128xi1>
    %52 = arith.extui %51 : vector<16x128xi1> to vector<16x128xi32>
    %53 = arith.sitofp %52 : vector<16x128xi32> to vector<16x128xf32>
    %54 = vector.broadcast %36 : vector<16x1xf32> to vector<16x128xf32>
    %55 = arith.mulf %53, %54 : vector<16x128xf32>
    %c0_12 = arith.constant 0 : index
    %c0_13 = arith.constant 0 : index
    %56 = vector.load %arg4[%c0_12, %c0_13] : memref<8x128xf32, #tpu.memory_space<vmem>>, vector<8x128xf32>
    %57 = vector.shape_cast %55 : vector<16x128xf32> to vector<2x8x128xf32>
    %cst_14 = arith.constant dense<0.000000e+00> : vector<8x128xf32>
    %58 = vector.multi_reduction <add>, %57, %cst_14 [0] : vector<2x8x128xf32> to vector<8x128xf32>
    %59 = arith.addf %56, %58 : vector<8x128xf32>
    %c0_15 = arith.constant 0 : index
    %c0_16 = arith.constant 0 : index
    %60 = vector.load %arg4[%c0_15, %c0_16] : memref<8x128xf32, #tpu.memory_space<vmem>>, vector<8x128xf32>
    tpu.vector_store %arg4[%c0_15, %c0_16], %59 {strides = array<i32>} : memref<8x128xf32, #tpu.memory_space<vmem>>, vector<8x128xf32>,
    return
  }
  func.func @transform_0(%arg0: i32, %arg1: i32) -> (i32, i32) {
    %c2_i32 = arith.constant 2 : i32
    %0 = arith.muli %arg0, %c2_i32 : i32
    %1 = arith.addi %0, %arg1 : i32
    %c3_i32 = arith.constant 3 : i32
    %2 = arith.minsi %1, %c3_i32 : i32
    %c0_i32 = arith.constant 0 : i32
    %c0_i32_0 = arith.constant 0 : i32
    return %2, %c0_i32 : i32, i32
  }
  func.func @transform_1(%arg0: i32, %arg1: i32) -> (i32, i32) {
    %c2_i32 = arith.constant 2 : i32
    %0 = arith.muli %arg0, %c2_i32 : i32
    %1 = arith.addi %0, %arg1 : i32
    %c3_i32 = arith.constant 3 : i32
    %2 = arith.minsi %1, %c3_i32 : i32
    %c0_i32 = arith.constant 0 : i32
    %c0_i32_0 = arith.constant 0 : i32
    return %2, %c0_i32 : i32, i32
  }
  func.func @transform_2(%arg0: i32, %arg1: i32) -> (i32, i32) {
    %c0_i32 = arith.constant 0 : i32
    %c0_i32_0 = arith.constant 0 : i32
    return %arg0, %c0_i32 : i32, i32
  }
}

</mosaic_0001>

<llo_original>
// kernel: tpu_custom_call.1
$region0: #{tpu_custom_call.1}
  #allocation0 [shape = 'u32[]', space=smem, size = 0x4, offset = 0x4, fixed_abs, tag = 'smem constant byte address 0x4 - core index']
  #allocation1 [shape = 'u32[72,128]{1,0:T(1,128)}', space=vmem, size = 0x9000, scoped, tag = 'internal scratch']
  %s0 = inlined_call_operand.vmem [shape: f32[56,32], index: 0, kind: input, shape index: {}]
  %s1 = inlined_call_operand.vmem [shape: s32[56,1], index: 1, kind: input, shape index: {}]
  %s2 = inlined_call_operand.hbm [shape: f32[16,128], index: 2, kind: output, shape index: {}]
  %s3 = sld [smem:[#allocation0]]
  $region45: #{tpu_custom_call.1} parent=0
    _
  %s5 = ssub.s32 1, %s3
  %s6 = scalar_select 0, %s5, %s3
  $region1: #{tpu_custom_call.1} parent=0
    #allocation2 [shape = 'u8[8192]{0}', space=vmem, size = 0x2000, scoped, tag = 'output window, operand 0']
    #allocation3 [shape = 's32[2]{0}', space=sflag, size = 0x8, scoped, tag = 'scoped memory for tpu_custom_call.1']
    %7 = vsyncpa [#allocation3], 0
    %s8 = scalar_lea.sflag [#allocation3], 1
    %9 = vsyncpa %s8, 0
    loop: start=0, step=1, limit=6
    $region2: #{tpu_custom_call.1} parent=1 // loop_pre_header
      _
    $region3: #{tpu_custom_call.1} parent=1 // loop_header
      %s11 = sphi 0, %s15
      %p12 = scmp.ge.s32.totalorder %s11, 6
      %s18 = sphi 0, %s30
      %s19 = sphi 0, %s26
      %s20 = sphi 0, %s18
      %s21 = sphi 0, %s19
      %s22 = sphi 0, %s20
      %s23 = sphi 0, %s21
      %s41 = sphi 0, %s43
      %s44 = sphi 0, %s41
      %s45 = sphi 0, %s44
      %s61 = sphi 0, %s45
      %s75 = sphi 0, %s77
      %s78 = sphi 0, %s75
      %s79 = sphi 0, %s78
      %s95 = sphi 0, %s79
      %s101 = sphi 0, %s103
      %s104 = sphi 0, %s101
      %s105 = sphi 0, %s104
      %s121 = sphi 0, %s105
    $region4: #{tpu_custom_call.1} parent=1 // loop_header_branch
      %14 = sbr.rel (%p12) target = $region8
    $region5: #{tpu_custom_call.1} parent=1 // loop_body
      %s16 = ssub.s32 %s11, 1
      %s17 = ssub.s32 %s11, 2
      %s24 = sadd.s32 1, %s19
      %p25 = scmp.ge.s32.totalorder %s24, 2
      %s26 = scalar_select %p25, 0, %s24
      %s27 = sadd.s32 1, %s18
      %s28 = scalar_select %p25, %s27, %s18
      %p29 = scmp.ge.s32.totalorder %s28, 2
      %s30 = scalar_select %p29, 0, %s28
      %s31 = smul.u32 %s18, 2
      %s32 = sadd.s32 %s31, %s19
      %p33 = scmp.lt.s32.totalorder %s32, 3
      %s34 = scalar_select %p33, %s32, 3
      %s35 = smul.u32 %s30, 2
      %s36 = sadd.s32 %s35, %s26
      %p37 = scmp.lt.s32.totalorder %s36, 3
      %s38 = scalar_select %p37, %s36, 3
      %s39 = ssub.s32 %s34, %s38
      %p40 = scmp.eq.s32.totalorder %s39, 0
      %s42 = sadd.s32 %s41, 1
      %s43 = scalar_select %p40, %s41, %s42
      %p46 = pneg %p40
      %p47 = scmp.eq.s32.totalorder %s11, 3
      %p48 = por %p46, %p47
      %p49 = scmp.ne.s32.totalorder %s41, %s44
      %p50 = scmp.eq.s32.totalorder %s11, 0
      %p51 = por %p49, %p50
      %p52 = scmp.ne.s32.totalorder %s41, %s44
      %p53 = scmp.eq.s32.totalorder %s16, 3
      %p54 = por %p52, %p53
      %p55 = scmp.ne.s32.totalorder %s44, %s45
      %p56 = scmp.eq.s32.totalorder %s16, 0
      %p57 = por %p55, %p56
      %p58 = scmp.ne.s32.totalorder %s44, %s45
      %p59 = scmp.eq.s32.totalorder %s17, 3
      %p60 = por %p58, %p59
      %p62 = scmp.ne.s32.totalorder %s45, %s61
      %p63 = scmp.eq.s32.totalorder %s17, 0
      %p64 = por %p62, %p63
      %s65 = smul.u32 %s18, 2
      %s66 = sadd.s32 %s65, %s19
      %p67 = scmp.lt.s32.totalorder %s66, 3
      %s68 = scalar_select %p67, %s66, 3
      %s69 = smul.u32 %s30, 2
      %s70 = sadd.s32 %s69, %s26
      %p71 = scmp.lt.s32.totalorder %s70, 3
      %s72 = scalar_select %p71, %s70, 3
      %s73 = ssub.s32 %s68, %s72
      %p74 = scmp.eq.s32.totalorder %s73, 0
      %s76 = sadd.s32 %s75, 1
      %s77 = scalar_select %p74, %s75, %s76
      %p80 = pneg %p74
      %p81 = scmp.eq.s32.totalorder %s11, 3
      %p82 = por %p80, %p81
      %p83 = scmp.ne.s32.totalorder %s75, %s78
      %p84 = scmp.eq.s32.totalorder %s11, 0
      %p85 = por %p83, %p84
      %p86 = scmp.ne.s32.totalorder %s75, %s78
      %p87 = scmp.eq.s32.totalorder %s16, 3
      %p88 = por %p86, %p87
      %p89 = scmp.ne.s32.totalorder %s78, %s79
      %p90 = scmp.eq.s32.totalorder %s16, 0
      %p91 = por %p89, %p90
      %p92 = scmp.ne.s32.totalorder %s78, %s79
      %p93 = scmp.eq.s32.totalorder %s17, 3
      %p94 = por %p92, %p93
      %p96 = scmp.ne.s32.totalorder %s79, %s95
      %p97 = scmp.eq.s32.totalorder %s17, 0
      %p98 = por %p96, %p97
      %s99 = ssub.s32 %s18, %s30
      %p100 = scmp.eq.s32.totalorder %s99, 0
      %s102 = sadd.s32 %s101, 1
      %s103 = scalar_select %p100, %s101, %s102
      %p106 = pneg %p100
      %p107 = scmp.eq.s32.totalorder %s11, 3
      %p108 = por %p106, %p107
      %p109 = scmp.ne.s32.totalorder %s101, %s104
      %p110 = scmp.eq.s32.totalorder %s11, 0
      %p111 = por %p109, %p110
      %p112 = scmp.ne.s32.totalorder %s101, %s104
      %p113 = scmp.eq.s32.totalorder %s16, 3
      %p114 = por %p112, %p113
      %p115 = scmp.ne.s32.totalorder %s104, %s105
      %p116 = scmp.eq.s32.totalorder %s16, 0
      %p117 = por %p115, %p116
      %p118 = scmp.ne.s32.totalorder %s104, %s105
      %p119 = scmp.eq.s32.totalorder %s17, 3
      %p120 = por %p118, %p119
      %p122 = scmp.ne.s32.totalorder %s105, %s121
      %p123 = scmp.eq.s32.totalorder %s17, 0
      %p124 = por %p122, %p123
      %p125 = scmp.le.s32.totalorder 1, %s11
      %p126 = scmp.lt.s32.totalorder %s11, 5
      %p127 = pnand %p125, %p126
      %p128 = pneg %p127
      // Predicated region
      $region9: #{tpu_custom_call.1} parent=5 // pred_check
        _
      $region10: #{tpu_custom_call.1} parent=5 // pred_check_branch
        %130 = sbr.rel (%p127) target = $region12
      $region11: #{tpu_custom_call.1} parent=5 // pred_region
        %s131 = ssub.s32 %s11, 1
      $region12: #{tpu_custom_call.1} parent=5 // pred_fallthru
        _
      %p132 = scmp.lt.s32.totalorder %s11, 4
      // Predicated region
      $region13: #{tpu_custom_call.1} parent=5 // pred_check
        %p133 = pneg %p132
      $region14: #{tpu_custom_call.1} parent=5 // pred_check_branch
        %135 = sbr.rel (%p133) target = $region16
      $region15: #{tpu_custom_call.1} parent=5 // pred_region
        // Predicated region
        $region17: #{tpu_custom_call.1} parent=15 // pred_check
          %p136 = pneg %p51
        $region18: #{tpu_custom_call.1} parent=15 // pred_check_branch
          %138 = sbr.rel (%p136) target = $region20
        $region19: #{tpu_custom_call.1} parent=15 // pred_region
          %s139 = smul.u32 %s18, 2
          %s140 = sadd.s32 %s139, %s19
          %p141 = scmp.lt.s32.totalorder %s140, 3
          %s142 = scalar_select %p141, %s140, 3
          %s143 = smul.u32 2, %s142
          %s144 = ssub.s32 7, %s143
          %p145 = scmp.lt.s32.totalorder %s144, 2
          %s146 = scalar_select %p145, %s144, 2
          %s147 = smul.u32 8, %s146
          %p148 = scmp.lt.s32.totalorder %s143, 6
          %s149 = scalar_select %p148, %s143, 6
          %s150 = smul.addr %s149, 8
          %s151 = scalar_lea.vmem %s0, %s150
          %s152 = smul.u32 %s18, 2
          %s153 = sadd.s32 %s152, %s19
          %p154 = scmp.lt.s32.totalorder %s153, 3
          %s155 = scalar_select %p154, %s153, 3
          %s156 = smul.u32 2, %s155
          %s157 = ssub.s32 7, %s156
          %p158 = scmp.lt.s32.totalorder %s157, 2
          %s159 = scalar_select %p158, %s157, 2
          %s160 = smul.u32 8, %s159
        $region20: #{tpu_custom_call.1} parent=15 // pred_fallthru
          _
        // Predicated region
        $region21: #{tpu_custom_call.1} parent=15 // pred_check
          %p161 = pneg %p85
        $region22: #{tpu_custom_call.1} parent=15 // pred_check_branch
          %163 = sbr.rel (%p161) target = $region24
        $region23: #{tpu_custom_call.1} parent=15 // pred_region
          %s164 = smul.u32 %s18, 2
          %s165 = sadd.s32 %s164, %s19
          %p166 = scmp.lt.s32.totalorder %s165, 3
          %s167 = scalar_select %p166, %s165, 3
          %s168 = smul.u32 2, %s167
          %s169 = ssub.s32 7, %s168
          %p170 = scmp.lt.s32.totalorder %s169, 2
          %s171 = scalar_select %p170, %s169, 2
          %s172 = smul.u32 8, %s171
          %p173 = scmp.lt.s32.totalorder %s168, 6
          %s174 = scalar_select %p173, %s168, 6
          %s175 = smul.addr %s174, 8
          %s176 = scalar_lea.vmem %s1, %s175
          %s177 = smul.u32 %s18, 2
          %s178 = sadd.s32 %s177, %s19
          %p179 = scmp.lt.s32.totalorder %s178, 3
          %s180 = scalar_select %p179, %s178, 3
          %s181 = smul.u32 2, %s180
          %s182 = ssub.s32 7, %s181
          %p183 = scmp.lt.s32.totalorder %s182, 2
          %s184 = scalar_select %p183, %s182, 2
          %s185 = smul.u32 8, %s184
        $region24: #{tpu_custom_call.1} parent=15 // pred_fallthru
          _
      $region16: #{tpu_custom_call.1} parent=5 // pred_fallthru
        _
      %p186 = scmp.le.s32.totalorder 1, %s11
      %p187 = scmp.lt.s32.totalorder %s11, 5
      %p188 = pnand %p186, %p187
      %p189 = pneg %p188
      // Predicated region
      $region25: #{tpu_custom_call.1} parent=5 // pred_check
        _
      $region26: #{tpu_custom_call.1} parent=5 // pred_check_branch
        %191 = sbr.rel (%p188) target = $region28
      $region27: #{tpu_custom_call.1} parent=5 // pred_region
        %s192 = ssub.s32 %s11, 1
        %s193 = smul.u32 %s20, 2
        %s194 = sadd.s32 %s193, %s21
        %p195 = scmp.lt.s32.totalorder %s194, 3
        %s196 = scalar_select %p195, %s194, 3
        %s197 = smul.u32 2, %s196
        %s198 = ssub.s32 7, %s197
        %p199 = scmp.lt.s32.totalorder %s198, 2
        %s200 = scalar_select %p199, %s198, 2
        %s201 = smul.u32 8, %s200
        %p202 = scmp.lt.s32.totalorder %s197, 6
        %s203 = scalar_select %p202, %s197, 6
        %s204 = smul.addr %s203, 8
        %s205 = scalar_lea.vmem %s0, %s204
        %p206 = pneg %p57
        %p207 = pneg %p54
        %s208 = smul.u32 %s20, 2
        %s209 = sadd.s32 %s208, %s21
        %p210 = scmp.lt.s32.totalorder %s209, 3
        %s211 = scalar_select %p210, %s209, 3
        %s212 = smul.u32 2, %s211
        %s213 = ssub.s32 7, %s212
        %p214 = scmp.lt.s32.totalorder %s213, 2
        %s215 = scalar_select %p214, %s213, 2
        %s216 = smul.u32 8, %s215
        %p217 = scmp.lt.s32.totalorder %s212, 6
        %s218 = scalar_select %p217, %s212, 6
        %s219 = smul.addr %s218, 8
        %s220 = scalar_lea.vmem %s1, %s219
        %p221 = pneg %p91
        %p222 = pneg %p88
        %p223 = pneg %p117
        %p224 = pneg %p114
        %s225 = sand.u32 %s104, 1
        %s226 = scalar_lea.sflag [#allocation3], %s225
        %s227 = sand.u32 %s104, 1
        %s228 = smul.addr %s227, 8
        %s229 = scalar_lea.vmem [#allocation2], %s228
        %s230 = smul.u32 %s20, 2
        %s231 = sadd.s32 %s230, %s21
        %p232 = scmp.lt.s32.totalorder %s231, 3
        %s233 = scalar_select %p232, %s231, 3
        %s234 = smul.u32 2, %s233
        %s235 = ssub.s32 7, %s234
        %p236 = scmp.lt.s32.totalorder %s235, 2
        %s237 = scalar_select %p236, %s235, 2
        %s238 = smul.u32 8, %s237
        %p239 = scmp.lt.s32.totalorder %s234, 6
        %s240 = scalar_select %p239, %s234, 6
        %s241 = smul.addr %s240, 8
        %s242 = scalar_lea.vmem %s0, %s241
        %s243 = smul.u32 %s20, 2
        %s244 = sadd.s32 %s243, %s21
        %p245 = scmp.lt.s32.totalorder %s244, 3
        %s246 = scalar_select %p245, %s244, 3
        %s247 = smul.u32 2, %s246
        %s248 = ssub.s32 7, %s247
        %p249 = scmp.lt.s32.totalorder %s248, 2
        %s250 = scalar_select %p249, %s248, 2
        %s251 = smul.u32 8, %s250
        %s252 = smul.u32 %s20, 2
        %s253 = sadd.s32 %s252, %s21
        %p254 = scmp.lt.s32.totalorder %s253, 3
        %s255 = scalar_select %p254, %s253, 3
        %s256 = smul.u32 2, %s255
        %s257 = ssub.s32 7, %s256
        %p258 = scmp.lt.s32.totalorder %s257, 2
        %s259 = scalar_select %p258, %s257, 2
        %s260 = smul.u32 8, %s259
        %p261 = scmp.lt.s32.totalorder %s256, 6
        %s262 = scalar_select %p261, %s256, 6
        %s263 = smul.addr %s262, 8
        %s264 = scalar_lea.vmem %s1, %s263
        %s265 = smul.u32 %s20, 2
        %s266 = sadd.s32 %s265, %s21
        %p267 = scmp.lt.s32.totalorder %s266, 3
        %s268 = scalar_select %p267, %s266, 3
        %s269 = smul.u32 2, %s268
        %s270 = ssub.s32 7, %s269
        %p271 = scmp.lt.s32.totalorder %s270, 2
        %s272 = scalar_select %p271, %s270, 2
        %s273 = smul.u32 8, %s272
        %p274 = scmp.eq.s32.totalorder %s21, 0
        // Predicated region
        $region29: #{tpu_custom_call.1} parent=27 // pred_check
          %p275 = pneg %p274
        $region30: #{tpu_custom_call.1} parent=27 // pred_check_branch
          %277 = sbr.rel (%p275) target = $region32
        $region31: #{tpu_custom_call.1} parent=27 // pred_region
          %278 = vst [vmem:[%s229] sm:$0xff] 0.0
        $region32: #{tpu_custom_call.1} parent=27 // pred_fallthru
          _
        %v279 = vld [vmem:[%s242] sm:$0xff]
        %v280 = vld [vmem:[%s242 + $0x8] sm:$0xff]
        %v281 = vld [vmem:[%s264] sm:$0xff]
        %v282 = vld [vmem:[%s264 + $0x8] sm:$0xff]
        %vm283 = vcmask 261120
        %v284 = vsel %vm283, %v279, -inf
        %285 = vmax.xlane.f32.xlu0 %v284
        %v286 = vpop.xlane.xlu0 %285
        %v287 = vsel %vm283, %v280, -inf
        %288 = vmax.xlane.f32.xlu0 %v287
        %v289 = vpop.xlane.xlu0 %288
        %v290 = vsub.f32 %v279, %v286
        %v291 = vsub.f32 %v280, %v289
        %v292 = vmul.f32 %v290, 1.442695
        %v293 = vpow.pop %v292
        %v294 = vmul.f32 %v291, 1.442695
        %v295 = vpow.pop %v294
        %v296 = vsel %vm283, %v293, 0.0
        %297 = vadd.xlane.f32.xlu0 %v296
        %v298 = vpop.xlane.xlu0 %297
        %v299 = vsel %vm283, %v295, 0.0
        %300 = vadd.xlane.f32.xlu0 %v299
        %v301 = vpop.xlane.xlu0 %300
        %v302 = vrcp.pop %v298
        %v303 = vmul.f32 %v298, %v302
        %v304 = vsub.f32 1.0, %v303
        %v305 = vmul.f32 %v302, %v304
        %v306 = vadd.f32 %v302, %v305
        %vm307 = vweird.f32 %v298
        %vm308 = vweird.f32 %v302
        %vm309 = vmor %vm307, %vm308
        %v310 = vsel %vm309, %v302, %v306
        %v311 = vand.u32 2147483647, %v298
        %vm312 = vcmp.eq.f32.partialorder %v311, 8.507059e+37
        %v313 = vand.u32 %v298, 2147483648
        %v314 = vor.u32 1.1754944e-38, %v313
        %v315 = vsel %vm312, %v314, %v310
        %v316 = vmul.f32 1.0, %v315
        %v317 = vrcp.pop %v301
        %v318 = vmul.f32 %v301, %v317
        %v319 = vsub.f32 1.0, %v318
        %v320 = vmul.f32 %v317, %v319
        %v321 = vadd.f32 %v317, %v320
        %vm322 = vweird.f32 %v301
        %vm323 = vweird.f32 %v317
        %vm324 = vmor %vm322, %vm323
        %v325 = vsel %vm324, %v317, %v321
        %v326 = vand.u32 2147483647, %v301
        %vm327 = vcmp.eq.f32.partialorder %v326, 8.507059e+37
        %v328 = vand.u32 %v301, 2147483648
        %v329 = vor.u32 1.1754944e-38, %v328
        %v330 = vsel %vm327, %v329, %v325
        %v331 = vmul.f32 1.0, %v330
        %v332 = vlaneseq
        %v333 = vand.u32 %v332, 127
        %vm334 = vcmp.ge.f32.partialorder %v279, %v286
        %vm335 = vcmp.ge.f32.partialorder %v280, %v289
        %v336 = vsel %vm334, %v333, 32
        %v337 = vsel %vm335, %v333, 32
        %v338 = vsel %vm283, %v336, 2147483647
        %v339 = vand.u32 %v338, 65535
        %v340 = vshra.s32 %v338, 16
        %v341 = vcvt.s32.f32 %v339
        %v342 = vcvt.s32.f32 %v340
        %343 = vmin.xlane.f32.xlu0 %v342
        %v344 = vpop.xlane.xlu0 %343
        %vm345 = vcmp.eq.f32.partialorder %v342, %v344
        %v346 = vsel %vm345, %v341, inf
        %347 = vmin.xlane.f32.xlu0 %v346
        %v348 = vpop.xlane.xlu0 %347
        %v349 = vcvt.f32.s32 %v348
        %v350 = vcvt.f32.s32 %v344
        %v351 = vshll.u32 %v350, 16
        %v352 = vadd.s32 %v351, %v349
        %v353 = vsel %vm283, %v337, 2147483647
        %v354 = vand.u32 %v353, 65535
        %v355 = vshra.s32 %v353, 16
        %v356 = vcvt.s32.f32 %v354
        %v357 = vcvt.s32.f32 %v355
        %358 = vmin.xlane.f32.xlu0 %v357
        %v359 = vpop.xlane.xlu0 %358
        %vm360 = vcmp.eq.f32.partialorder %v357, %v359
        %v361 = vsel %vm360, %v356, inf
        %362 = vmin.xlane.f32.xlu0 %v361
        %v363 = vpop.xlane.xlu0 %362
        %v364 = vcvt.f32.s32 %v363
        %v365 = vcvt.f32.s32 %v359
        %v366 = vshll.u32 %v365, 16
        %v367 = vadd.s32 %v366, %v364
        %vm368 = vcmp.eq.s32.totalorder %v352, %v281
        %vm369 = vcmp.eq.s32.totalorder %v367, %v282
        %v370 = vsel %vm368, 1, 0
        %v371 = vsel %vm369, 1, 0
        %v372 = vcvt.s32.f32 %v370
        %v373 = vcvt.s32.f32 %v371
        %v374 = vlaneseq
        %v375 = vshrl.u32 %v374, 7
        %v376 = vadd.s32 %v375, 8
        %s377 = smul.u32 %s20, 2
        %s378 = sadd.s32 %s377, %s21
        %s379 = smul.u32 %s378, 16
        %v380 = vstv %s379
        %v381 = vadd.s32 %v380, %v375
        %v382 = vadd.s32 %v380, %v376
        %vm383 = vcmp.lt.s32.totalorder %v381, 56
        %vm384 = vcmp.lt.s32.totalorder %v382, 56
        %v385 = vsel %vm383, %v316, 0.0
        %v386 = vsel %vm384, %v331, 0.0
        %v387 = vsub.f32 %v385, %v372
        %v388 = vsub.f32 %v386, %v373
        %v389 = vsel %vm383, %v387, 0.0
        %v390 = vsel %vm384, %v388, 0.0
        %v391 = vcvt.s32.f32 %v333
        %v392 = vrcp.pop 20.0
        %v393 = vmul.f32 20.0, %v392
        %v394 = vsub.f32 1.0, %v393
        %v395 = vmul.f32 %v392, %v394
        %v396 = vadd.f32 %v392, %v395
        %vm397 = vweird.f32 %v392
        %v398 = vsel %vm397, %v392, %v396
        %v399 = vmul.f32 %v391, %v398
        %v400 = vadd.f32 %v391, 1.0
        %v401 = vmul.f32 %v400, %v398
        %vm402 = vcmp.gt.f32.partialorder %v385, %v399
        %vm403 = vcmp.gt.f32.partialorder %v386, %v399
        %vm404 = vcmp.le.f32.partialorder %v385, %v401
        %vm405 = vcmp.le.f32.partialorder %v386, %v401
        %vm406 = vmand %vm402, %vm404
        %vm407 = vmand %vm403, %vm405
        %v408 = vsel %vm406, 1, 0
        %v409 = vsel %vm407, 1, 0
        %v410 = vcvt.s32.f32 %v408
        %v411 = vcvt.s32.f32 %v409
        %413 = vset.pattern.permute.xlu0 0
        %414 = vperm.xlu0 %413, %v389
        %v415 = vpop.permute.xlu0 %414
        %418 = vset.pattern.permute.xlu0 0
        %419 = vperm.xlu0 %418, %v390
        %v420 = vpop.permute.xlu0 %419
        %v422 = vmul.f32 %v410, %v415
        %v423 = vmul.f32 %v411, %v420
        %v424 = vld [vmem:[%s229] sm:$0xff]
        %v425 = vadd.f32 %v422, %v423
        %v426 = vadd.f32 %v424, %v425
        %427 = vst [vmem:[%s229] sm:$0xff] %v426
        %s428 = sand.u32 %s104, 1
        %s429 = scalar_lea.sflag [#allocation3], %s428
        %s430 = sand.u32 %s104, 1
        %s431 = smul.addr %s430, 8
        %s432 = scalar_lea.vmem [#allocation2], %s431
        // Predicated region
        $region33: #{tpu_custom_call.1} parent=27 // pred_check
          %p433 = pneg %p114
        $region34: #{tpu_custom_call.1} parent=27 // pred_check_branch
          %435 = sbr.rel (%p433) target = $region36
        $region35: #{tpu_custom_call.1} parent=27 // pred_region
          %437 = vsyncadd %s429, 0
          %s438 = smul.addr %s20, 8
          %s439 = scalar_lea.hbm %s2, %s438
          %s441 = sshll.u32 %s432, 4
          %s442 = int_to_ptr.vmem [resolvable:$true] %s441
          %s443 = sshll.u32 %s439, 4
          %s444 = int_to_ptr.hbm [resolvable:$true] %s443
          %446 = dma.vmem_to_hbm [thread:$0]  %s442, 128, %s444, %s429
        $region36: #{tpu_custom_call.1} parent=27 // pred_fallthru
          _
      $region28: #{tpu_custom_call.1} parent=5 // pred_fallthru
        _
      %p447 = scmp.le.s32.totalorder 2, %s11
      // Predicated region
      $region37: #{tpu_custom_call.1} parent=5 // pred_check
        %p448 = pneg %p447
      $region38: #{tpu_custom_call.1} parent=5 // pred_check_branch
        %450 = sbr.rel (%p448) target = $region40
      $region39: #{tpu_custom_call.1} parent=5 // pred_region
        %s451 = ssub.s32 %s11, 2
        // Predicated region
        $region41: #{tpu_custom_call.1} parent=39 // pred_check
          %p452 = pneg %p120
        $region42: #{tpu_custom_call.1} parent=39 // pred_check_branch
          %454 = sbr.rel (%p452) target = $region44
        $region43: #{tpu_custom_call.1} parent=39 // pred_region
          %s455 = sand.u32 %s105, 1
          %s456 = scalar_lea.sflag [#allocation3], %s455
          %s457 = sand.u32 %s105, 1
          %s458 = smul.addr %s457, 8
          %s459 = scalar_lea.vmem [#allocation2], %s458
          %461 = dma.done %s456, 128
        $region44: #{tpu_custom_call.1} parent=39 // pred_fallthru
          _
      $region40: #{tpu_custom_call.1} parent=5 // pred_fallthru
        _
    $region6: #{tpu_custom_call.1} parent=1 // loop_footer
      %s15 = sadd.s32 1, %s11
    $region7: #{tpu_custom_call.1} parent=1 // loop_footer_branch
      %10 = sbr.rel target = $region3
    $region8: #{tpu_custom_call.1} parent=1 // loop_exit
      _
    %462 = vsyncpa [#allocation3], 1
    %s463 = scalar_lea.sflag [#allocation3], 1
    %464 = vsyncpa %s463, 1

</llo_original>
